<compile_context>
chip_gen: v7x
topology: tpu7x:2x2x1
jax: 0.10.0
libtpu: 0.0.40
codegen_flags: <defaults>
</compile_context>

<pallas_src>
import functools

import jax
import jax.numpy as jnp
from jax.experimental import pallas as pl
from jax.experimental.pallas import tpu as pltpu


def _round_up(x, m):
    return ((x + m - 1) // m) * m


def _vmem_budget_bytes():
    """~70% of physical VMEM, generation-aware (v5e/v6e 128 MiB, v7x 64 MiB)."""
    try:
        cap = int(pltpu.get_tpu_info().vmem_capacity_bytes)
    except Exception:
        cap = 64 << 20  # conservative v7x-sized fallback
    return int(cap * 0.70)


# ---------------------------------------------------------------------------
# Pallas kernel: scores tile = q_rows @ table_slab  (table is K-major, so this
# is a plain A@B -- the MXU is fed straight from the row-major VMEM slab with
# no XLU transpose).
# ---------------------------------------------------------------------------
def _cp_forward_kernel(q_ref, rhsw_ref, out_ref, *, tb, q_resident):
    # q_ref    : (Bp, Rp) resident fused queries, or (tb, Rp) streamed tile
    # rhsw_ref : (Rp, tn) K-major slab of the padded rhs embedding table
    # out_ref  : (tb, tn) scores (f32)
    if q_resident:
        start = pl.multiple_of(pl.program_id(1) * tb, tb)
        q = q_ref[pl.ds(start, tb), :]
    else:
        q = q_ref[...]
    out_ref[...] = jnp.dot(
        q, rhsw_ref[...], preferred_element_type=jnp.float32
    ).astype(out_ref.dtype)


def cp_scores_pallas(q, rhs_weight_t_padded, num_rhs, *, tb=128, tn=1024):
    """scores[:B, :num_rhs] = q @ rhs_weight_t_padded  via a tiled Pallas kernel.

    `rhs_weight_t_padded` is the K-major table of shape (Rp, Np): rank padded
    to a multiple of 256, entities padded to a multiple of the candidate tile
    (both done once at model construction).
    """
    B, R = q.shape
    Rp, Np = rhs_weight_t_padded.shape
    compute_dtype = rhs_weight_t_padded.dtype
    itemsize = jnp.dtype(compute_dtype).itemsize
    sublane = 16 if itemsize == 2 else 8          # bf16 packs 2 rows / sublane

    tn = min(tn, Np)
    assert Np % tn == 0 and Rp % 128 == 0, "rhs table must be pre-padded"
    assert R <= Rp

    # Batch tile: as large as requested but no larger than the (padded) batch.
    tb = min(tb, _round_up(B, sublane))
    Bp = _round_up(B, tb)

    # Pad only the small query block per call (zero rank padding is benign).
    q_p = q.astype(compute_dtype)
    if Bp != B or Rp != R:
        q_p = jnp.pad(q_p, ((0, Bp - B), (0, Rp - R)))

    # ---- VMEM budgeting (generation-aware) --------------------------------
    budget = _vmem_budget_bytes()
    base = 2 * Rp * tn * itemsize + 2 * tb * tn * 4     # table slab + out (x2 buf)
    resident_need = base + 2 * Bp * Rp * itemsize       # whole q block resident
    streaming_need = base + 2 * tb * Rp * itemsize      # q tile re-fetched/step
    q_resident = resident_need <= budget
    vmem_need = resident_need if q_resident else streaming_need
    if not q_resident and streaming_need > budget:
        # TODO(synk): tile the rank axis (reduction grid dim + f32 accumulator)
        # for ranks too large even for a streamed 128-wide candidate tile.
        raise ValueError(
            "CP score tile does not fit VMEM; use a bf16 table or smaller tn."
        )
    vmem_limit = int(min(max(vmem_need + (2 << 20), 16 << 20), budget))

    # Candidate axis outermost, batch axis innermost: the big (Rp, tn) table
    # slab only changes with the outer index, so it streams from HBM exactly
    # once per candidate tile.
    grid = (Np // tn, Bp // tb)

    if q_resident:
        q_spec = pl.BlockSpec((Bp, Rp), lambda j, i: (0, 0))   # DMA'd once
    else:
        q_spec = pl.BlockSpec((tb, Rp), lambda j, i: (i, 0))
    rhs_spec = pl.BlockSpec((Rp, tn), lambda j, i: (0, j))     # K-major slab
    out_spec = pl.BlockSpec((tb, tn), lambda j, i: (i, j))

    q_bytes = (Bp * Rp if q_resident else (Np // tn) * Bp * Rp) * itemsize
    cost = pl.CostEstimate(
        flops=2 * Bp * Np * Rp,
        transcendentals=0,
        bytes_accessed=q_bytes + Rp * Np * itemsize + Bp * Np * 4,
    )

    kernel = functools.partial(_cp_forward_kernel, tb=tb, q_resident=q_resident)

    scores_p = pl.pallas_call(
        kernel,
        out_shape=jax.ShapeDtypeStruct((Bp, Np), jnp.float32),
        grid_spec=pl.GridSpec(
            grid=grid,
            in_specs=[q_spec, rhs_spec],
            out_specs=out_spec,
        ),
        compiler_params=pltpu.CompilerParams(
            # Only the candidate axis is megacore-shardable: splitting the
            # batch axis on v7x would make each core stream the whole table.
            dimension_semantics=("parallel", "arbitrary"),
            vmem_limit_bytes=vmem_limit,
        ),
        cost_estimate=cost,
    )(q_p, rhs_weight_t_padded)

    return scores_p[:B, :num_rhs]


# ---------------------------------------------------------------------------
# CP module in JAX (parameter setup + gather are glue; scores use the kernel)
# ---------------------------------------------------------------------------
class CP:
    def __init__(self, sizes, rank, init_size=0.001, *, key,
                 compute_dtype=jnp.float32, tb=128, tn=1024):
        # compute_dtype=jnp.bfloat16 halves the dominant table stream (f32
        # accumulation is kept); f32 is the default for exact parity with the
        # PyTorch module.  tb=128 suits every generation (256 can help on
        # v6e/v7x for very large batches); tn=1024 gives lane-dense writebacks
        # and few grid steps, and is auto-shrunk to fit the VMEM budget.
        self.sizes = sizes
        self.rank = rank
        self.compute_dtype = jnp.dtype(compute_dtype)

        k0, k1, k2 = jax.random.split(key, 3)
        # nn.Embedding default init is N(0, 1); module scales by init_size.
        self.lhs_w = jax.random.normal(k0, (sizes[0], rank), jnp.float32) * init_size
        self.rel_w = jax.random.normal(k1, (sizes[1], rank), jnp.float32) * init_size
        self.rhs_w = jax.random.normal(k2, (sizes[2], rank), jnp.float32) * init_size

        # ---- one-time K-major padding of the candidate table ------------------
        r_pad = _round_up(rank, 256)          # full K passes on 256-wide MXUs
        itemsize = self.compute_dtype.itemsize
        budget = _vmem_budget_bytes()
        tn_eff = min(tn, _round_up(sizes[2], 128))

        def _footprint(t):  # double-buffered slab + streamed q tile + output
            return 2 * (t * r_pad + tb * r_pad) * itemsize + 2 * tb * t * 4

        while tn_eff > 128 and _footprint(tn_eff) > budget:
            tn_eff -= 128                      # shrink candidate tile to fit VMEM
        if _footprint(tn_eff) > budget:
            # TODO(synk): tile the rank axis (reduction grid dim) for huge ranks.
            raise ValueError("rank too large for a single-K-pass CP score tile")
        self._tn = tn_eff
        self._tb = tb

        n_pad = _round_up(sizes[2], tn_eff)
        # K-major (Rp, Np): the kernel does plain q @ W, no in-kernel transpose.
        self.rhs_w_t_padded = (
            jnp.pad(self.rhs_w, ((0, n_pad - sizes[2]), (0, r_pad - rank)))
            .T.astype(self.compute_dtype)
        )

    def forward(self, x):
        # x: (B, 3) int32 triples (lhs_idx, rel_idx, rhs_idx)
        # NOTE: jnp.take clamps out-of-range indices (PyTorch would error).
        lhs = jnp.take(self.lhs_w, x[:, 0], axis=0)   # (B, R)
        rel = jnp.take(self.rel_w, x[:, 1], axis=0)   # (B, R)
        rhs = jnp.take(self.rhs_w, x[:, 2], axis=0)   # (B, R)
        q = lhs * rel                                  # fused query embedding
        scores = cp_scores_pallas(
            q, self.rhs_w_t_padded, self.sizes[2], tb=self._tb, tn=self._tn
        )                                              # (B, n_rhs)
        return scores, (lhs, rel, rhs)

    def score(self, x):
        # torch.sum(lhs * rel * rhs, 1, keepdim=True)  (glue, not hot path)
        lhs = jnp.take(self.lhs_w, x[:, 0], axis=0)
        rel = jnp.take(self.rel_w, x[:, 1], axis=0)
        rhs = jnp.take(self.rhs_w, x[:, 2], axis=0)
        return jnp.sum(lhs * rel * rhs, axis=1, keepdims=True)

    # TODO(synk): get_ranking's host-side per-query filtering (dict lookups,
    # in-place masking) has no clean Pallas equivalent and is not implemented.


if __name__ == "__main__":
    key = jax.random.PRNGKey(0)
    k_model, k_q = jax.random.split(key)

    # sizes = (n_lhs_entities, n_relations, n_rhs_entities), rank = hidden dim
    sizes = (16, 8, 16)
    rank = 32
    batch = 4

    kq0, kq1, kq2 = jax.random.split(k_q, 3)
    x = jnp.stack(
        [
            jax.random.randint(kq0, (batch,), 0, sizes[0]),
            jax.random.randint(kq1, (batch,), 0, sizes[1]),
            jax.random.randint(kq2, (batch,), 0, sizes[2]),
        ],
        axis=1,
    ).astype(jnp.int32)

    # --- f32 model (exact match against plain-JAX reference) ---
    model = CP(sizes, rank, init_size=0.001, key=k_model)
    scores, (lhs_e, rel_e, rhs_e) = model.forward(x)
    scores = jax.block_until_ready(scores)

    ref = (lhs_e * rel_e) @ model.rhs_w.T
    assert scores.shape == (batch, sizes[2])
    assert lhs_e.shape == (batch, rank) and rhs_e.shape == (batch, rank)
    assert jnp.allclose(scores, ref, atol=1e-6, rtol=1e-5)

    targets = model.score(x)
    assert targets.shape == (batch, 1)

    # --- bf16 compute-dtype model (halves HBM table traffic; f32 accumulation) ---
    model_bf16 = CP(sizes, rank, init_size=0.001, key=k_model,
                    compute_dtype=jnp.bfloat16)
    scores_bf16, _ = model_bf16.forward(x)
    scores_bf16 = jax.block_until_ready(scores_bf16)
    assert scores_bf16.shape == (batch, sizes[2])
    assert jnp.allclose(scores_bf16, ref, atol=1e-8, rtol=1e-1)

    print("KERNEL_OK")
</pallas_src>

<mosaic_0001>
module attributes {stable_mosaic.version = 11 : i64} {
  func.func @_cp_forward_kernel(%arg0: i32, %arg1: i32, %arg2: memref<8x256xf32, #tpu.memory_space<vmem>>, %arg3: memref<256x128xf32, #tpu.memory_space<vmem>>, %arg4: memref<8x128xf32, #tpu.memory_space<vmem>>) attributes {dimension_semantics = [#tpu.dimension_semantics<parallel>, #tpu.dimension_semantics<arbitrary>], iteration_bounds = array<i64: 1, 1>, scalar_prefetch = 0 : i64, scratch_operands = 0 : i64, tpu.core_type = #tpu.core_type<tc>, window_params = [{pipeline_mode = #tpu.pipeline_mode<synchronous>, transform_indices = @transform_0, window_bounds = array<i64: 8, 256>}, {transform_indices = @transform_1, window_bounds = array<i64: 256, 128>}, {transform_indices = @transform_2, window_bounds = array<i64: 8, 128>}]} {
    %c8_i32 = arith.constant 8 : i32
    %0 = arith.muli %arg1, %c8_i32 : i32
    %1 = tpu.assume_multiple %0, 8 : i32
    %2 = arith.index_cast %1 : i32 to index
    %c0 = arith.constant 0 : index
    %3 = vector.load %arg2[%2, %c0] : memref<8x256xf32, #tpu.memory_space<vmem>>, vector<8x256xf32>
    %c0_0 = arith.constant 0 : index
    %c0_1 = arith.constant 0 : index
    %4 = vector.load %arg3[%c0_0, %c0_1] : memref<256x128xf32, #tpu.memory_space<vmem>>, vector<256x128xf32>
    %cst = arith.constant dense<0.000000e+00> : vector<8x128xf32>
    %5 = tpu.matmul %3, %4, %cst {dimension_numbers = #tpu.dot_dimension_numbers<[1], [0], [0], [1], [0, 0, 1, 1], [], []>} : vector<8x256xf32>, vector<256x128xf32>, vector<8x128xf32> -> vector<8x128xf32>
    %c0_2 = arith.constant 0 : index
    %c0_3 = arith.constant 0 : index
    %6 = vector.load %arg4[%c0_2, %c0_3] : memref<8x128xf32, #tpu.memory_space<vmem>>, vector<8x128xf32>
    tpu.vector_store %arg4[%c0_2, %c0_3], %5 {strides = array<i32>} : memref<8x128xf32, #tpu.memory_space<vmem>>, vector<8x128xf32>,
    return
  }
  func.func @transform_0(%arg0: i32, %arg1: i32) -> (i32, i32) {
    %c0_i32 = arith.constant 0 : i32
    %c0_i32_0 = arith.constant 0 : i32
    %c0_i32_1 = arith.constant 0 : i32
    return %c0_i32, %c0_i32_0 : i32, i32
  }
  func.func @transform_1(%arg0: i32, %arg1: i32) -> (i32, i32) {
    %c0_i32 = arith.constant 0 : i32
    %c0_i32_0 = arith.constant 0 : i32
    return %c0_i32, %arg0 : i32, i32
  }
  func.func @transform_2(%arg0: i32, %arg1: i32) -> (i32, i32) {
    %c0_i32 = arith.constant 0 : i32
    return %arg1, %arg0 : i32, i32
  }
}

</mosaic_0001>

<llo_original>
// kernel: tpu_custom_call.1
$region0: #{tpu_custom_call.1}
  #allocation0 [shape = 'u32[]', space=smem, size = 0x4, offset = 0x4, fixed_abs, tag = 'smem constant byte address 0x4 - core index']
  #allocation1 [shape = 'u32[144,128]{1,0:T(1,128)}', space=vmem, size = 0x12000, scoped, tag = 'internal scratch']
  %s0 = inlined_call_operand.hbm [shape: f32[8,256], index: 0, kind: input, shape index: {}]
  %s1 = inlined_call_operand.hbm [shape: f32[256,128], index: 1, kind: input, shape index: {}]
  %s2 = inlined_call_operand.hbm [shape: f32[8,128], index: 2, kind: output, shape index: {}]
  %s3 = sld [smem:[#allocation0]]
  $region26: #{tpu_custom_call.1} parent=0
    _
  %s5 = ssub.s32 1, %s3
  %s6 = scalar_select 0, %s5, %s3
  $region1: #{tpu_custom_call.1} parent=0
    #allocation2 [shape = 'u8[8192]{0}', space=vmem, size = 0x2000, scoped, tag = 'input window, operand 0, single buffered']
    #allocation3 [shape = 's32[1]{0}', space=sflag, size = 0x4, scoped, tag = 'scoped memory for tpu_custom_call.1']
    #allocation4 [shape = 's32[1]{0}', space=sflag, size = 0x4, scoped, tag = 'scoped memory for tpu_custom_call.1']
    #allocation5 [shape = 'u8[131072]{0}', space=vmem, size = 0x20000, scoped, tag = 'input window, operand 1, single buffered']
    #allocation6 [shape = 's32[1]{0}', space=sflag, size = 0x4, scoped, tag = 'scoped memory for tpu_custom_call.1']
    #allocation7 [shape = 'u8[4096]{0}', space=vmem, size = 0x1000, scoped, tag = 'output window, operand 0, single buffered']
    %7 = vsyncpa [#allocation3], 0
    %8 = vsyncpa [#allocation6], 0
    %9 = vsyncpa [#allocation4], 0
    // Predicated region
    $region2: #{tpu_custom_call.1} parent=1 // pred_check
      _
    $region3: #{tpu_custom_call.1} parent=1 // pred_check_branch
      %11 = sbr.rel (0) target = $region5
    $region4: #{tpu_custom_call.1} parent=1 // pred_region
      %s13 = ssub.s32 256, 256
      %14 = vsyncadd [#allocation3], %s13
      %s16 = sshll.u32 [#allocation2], 4
      %s17 = int_to_ptr.vmem [resolvable:$true] %s16
      %19 = dma.hbm_to_vmem [thread:$0]  %s0, 256, %s17, [#allocation3]
    $region5: #{tpu_custom_call.1} parent=1 // pred_fallthru
      _
    // Predicated region
    $region6: #{tpu_custom_call.1} parent=1 // pred_check
      _
    $region7: #{tpu_custom_call.1} parent=1 // pred_check_branch
      %21 = sbr.rel (0) target = $region9
    $region8: #{tpu_custom_call.1} parent=1 // pred_region
      %s23 = ssub.s32 4096, 4096
      %24 = vsyncadd [#allocation6], %s23
      %s25 = sshll.u32 [#allocation5], 4
      %s26 = int_to_ptr.vmem [resolvable:$true] %s25
      %31 = dma.hbm_to_vmem [thread:$0]  %s1, 4096, %s26, [#allocation6], 128, 128, 8
    $region9: #{tpu_custom_call.1} parent=1 // pred_fallthru
      _
    // Predicated region
    $region10: #{tpu_custom_call.1} parent=1 // pred_check
      _
    $region11: #{tpu_custom_call.1} parent=1 // pred_check_branch
      %33 = sbr.rel (0) target = $region13
    $region12: #{tpu_custom_call.1} parent=1 // pred_region
      %34 = dma.done [#allocation3], 256
    $region13: #{tpu_custom_call.1} parent=1 // pred_fallthru
      _
    // Predicated region
    $region14: #{tpu_custom_call.1} parent=1 // pred_check
      _
    $region15: #{tpu_custom_call.1} parent=1 // pred_check_branch
      %36 = sbr.rel (0) target = $region17
    $region16: #{tpu_custom_call.1} parent=1 // pred_region
      %37 = dma.done [#allocation6], 4096
    $region17: #{tpu_custom_call.1} parent=1 // pred_fallthru
      _
    %s38 = smul.u32 0, 8
    %s39 = sshra.s32 %s38, 3
    %s40 = sand.u32 %s38, 7
    %s41 = smul.u32 %s39, 2
    %s42 = smul.addr %s41, 8
    %s43 = scalar_lea.vmem [#allocation2], %s42
    %v44 = vld [vmem:[%s43] sm:$0xff]
    %v45 = vld [vmem:[%s43 + $0x8] sm:$0xff]
    %v46 = vld [vmem:[#allocation5] sm:$0xff]
    %v47 = vld [vmem:[#allocation5 + $0x8] sm:$0xff]
    %v48 = vld [vmem:[#allocation5 + $0x10] sm:$0xff]
    %v49 = vld [vmem:[#allocation5 + $0x18] sm:$0xff]
    %v50 = vld [vmem:[#allocation5 + $0x20] sm:$0xff]
    %v51 = vld [vmem:[#allocation5 + $0x28] sm:$0xff]
    %v52 = vld [vmem:[#allocation5 + $0x30] sm:$0xff]
    %v53 = vld [vmem:[#allocation5 + $0x38] sm:$0xff]
    %v54 = vld [vmem:[#allocation5 + $0x40] sm:$0xff]
    %v55 = vld [vmem:[#allocation5 + $0x48] sm:$0xff]
    %v56 = vld [vmem:[#allocation5 + $0x50] sm:$0xff]
    %v57 = vld [vmem:[#allocation5 + $0x58] sm:$0xff]
    %v58 = vld [vmem:[#allocation5 + $0x60] sm:$0xff]
    %v59 = vld [vmem:[#allocation5 + $0x68] sm:$0xff]
    %v60 = vld [vmem:[#allocation5 + $0x70] sm:$0xff]
    %v61 = vld [vmem:[#allocation5 + $0x78] sm:$0xff]
    %v62 = vld [vmem:[#allocation5 + $0x80] sm:$0xff]
    %v63 = vld [vmem:[#allocation5 + $0x88] sm:$0xff]
    %v64 = vld [vmem:[#allocation5 + $0x90] sm:$0xff]
    %v65 = vld [vmem:[#allocation5 + $0x98] sm:$0xff]
    %v66 = vld [vmem:[#allocation5 + $0xa0] sm:$0xff]
    %v67 = vld [vmem:[#allocation5 + $0xa8] sm:$0xff]
    %v68 = vld [vmem:[#allocation5 + $0xb0] sm:$0xff]
    %v69 = vld [vmem:[#allocation5 + $0xb8] sm:$0xff]
    %v70 = vld [vmem:[#allocation5 + $0xc0] sm:$0xff]
    %v71 = vld [vmem:[#allocation5 + $0xc8] sm:$0xff]
    %v72 = vld [vmem:[#allocation5 + $0xd0] sm:$0xff]
    %v73 = vld [vmem:[#allocation5 + $0xd8] sm:$0xff]
    %v74 = vld [vmem:[#allocation5 + $0xe0] sm:$0xff]
    %v75 = vld [vmem:[#allocation5 + $0xe8] sm:$0xff]
    %v76 = vld [vmem:[#allocation5 + $0xf0] sm:$0xff]
    %v77 = vld [vmem:[#allocation5 + $0xf8] sm:$0xff]
    %78 = vmatprep.subr.mxu0 0.0
    %79 = vmatpush1.msra.mxu0 %v46
    %80 = vmatprep.subr.mxu0 0.0
    %81 = vmatpush1.msra.mxu0 %v47
    %82 = vmatprep.subr.mxu0 0.0
    %83 = vmatpush1.msra.mxu0 %v48
    %84 = vmatprep.subr.mxu0 0.0
    %85 = vmatpush1.msra.mxu0 %v49
    %86 = vmatprep.subr.mxu0 0.0
    %87 = vmatpush1.msra.mxu0 %v50
    %88 = vmatprep.subr.mxu0 0.0
    %89 = vmatpush1.msra.mxu0 %v51
    %90 = vmatprep.subr.mxu0 0.0
    %91 = vmatpush1.msra.mxu0 %v52
    %92 = vmatprep.subr.mxu0 0.0
    %93 = vmatpush1.msra.mxu0 %v53
    %94 = vmatprep.subr.mxu0 0.0
    %95 = vmatpush1.msra.mxu0 %v54
    %96 = vmatprep.subr.mxu0 0.0
    %97 = vmatpush1.msra.mxu0 %v55
    %98 = vmatprep.subr.mxu0 0.0
    %99 = vmatpush1.msra.mxu0 %v56
    %100 = vmatprep.subr.mxu0 0.0
    %101 = vmatpush1.msra.mxu0 %v57
    %102 = vmatprep.subr.mxu0 0.0
    %103 = vmatpush1.msra.mxu0 %v58
    %104 = vmatprep.subr.mxu0 0.0
    %105 = vmatpush1.msra.mxu0 %v59
    %106 = vmatprep.subr.mxu0 0.0
    %107 = vmatpush1.msra.mxu0 %v60
    %108 = vmatprep.subr.mxu0 0.0
    %109 = vmatpush1.msra.mxu0 %v61
    %110 = vmatprep.subr.mxu0 0.0
    %111 = vmatpush1.msra.mxu0 %v62
    %112 = vmatprep.subr.mxu0 0.0
    %113 = vmatpush1.msra.mxu0 %v63
    %114 = vmatprep.subr.mxu0 0.0
    %115 = vmatpush1.msra.mxu0 %v64
    %116 = vmatprep.subr.mxu0 0.0
    %117 = vmatpush1.msra.mxu0 %v65
    %118 = vmatprep.subr.mxu0 0.0
    %119 = vmatpush1.msra.mxu0 %v66
    %120 = vmatprep.subr.mxu0 0.0
    %121 = vmatpush1.msra.mxu0 %v67
    %122 = vmatprep.subr.mxu0 0.0
    %123 = vmatpush1.msra.mxu0 %v68
    %124 = vmatprep.subr.mxu0 0.0
    %125 = vmatpush1.msra.mxu0 %v69
    %126 = vmatprep.subr.mxu0 0.0
    %127 = vmatpush1.msra.mxu0 %v70
    %128 = vmatprep.subr.mxu0 0.0
    %129 = vmatpush1.msra.mxu0 %v71
    %130 = vmatprep.subr.mxu0 0.0
    %131 = vmatpush1.msra.mxu0 %v72
    %132 = vmatprep.subr.mxu0 0.0
    %133 = vmatpush1.msra.mxu0 %v73
    %134 = vmatprep.subr.mxu0 0.0
    %135 = vmatpush1.msra.mxu0 %v74
    %136 = vmatprep.subr.mxu0 0.0
    %137 = vmatpush1.msra.mxu0 %v75
    %138 = vmatprep.subr.mxu0 0.0
    %139 = vmatpush1.msra.mxu0 %v76
    %140 = vmatprep.subr.mxu0 0.0
    %141 = vmatpush1.msra.mxu0 %v77
    %142 = vmatprep.mubr.f32.mxu0 %v45
    %143 = vmatmul.mubr.f32.gmra.mrb[0].mxu0 %v44
    %v144 = vpop.f32.mrb[0].mxu0
    %v145 = vadd.f32 0.0, %v144
    %v146 = vpop.f32.mrb[0].mxu0
    %147 = vdwg.mxu0
    %148 = vst [vmem:[#allocation7] sm:$0xff] %v145
    // Predicated region
    $region18: #{tpu_custom_call.1} parent=1 // pred_check
      _
    $region19: #{tpu_custom_call.1} parent=1 // pred_check_branch
      %150 = sbr.rel (0) target = $region21
    $region20: #{tpu_custom_call.1} parent=1 // pred_region
      %s152 = ssub.s32 128, 128
      %153 = vsyncadd [#allocation4], %s152
      %s155 = sshll.u32 [#allocation7], 4
      %s156 = int_to_ptr.vmem [resolvable:$true] %s155
      %158 = dma.vmem_to_hbm [thread:$0]  %s156, 128, %s2, [#allocation4]
    $region21: #{tpu_custom_call.1} parent=1 // pred_fallthru
      _
    // Predicated region
    $region22: #{tpu_custom_call.1} parent=1 // pred_check
      _
    $region23: #{tpu_custom_call.1} parent=1 // pred_check_branch
      %160 = sbr.rel (0) target = $region25
    $region24: #{tpu_custom_call.1} parent=1 // pred_region
      %161 = dma.done [#allocation4], 128
    $region25: #{tpu_custom_call.1} parent=1 // pred_fallthru
      _
    %162 = vsyncpa [#allocation3], 1
    %163 = vsyncpa [#allocation6], 1
    %164 = vsyncpa [#allocation4], 1

</llo_original>
